<compile_context>
chip_gen: v6e
topology: v6e:2x2x1
jax: 0.10.0
libtpu: 0.0.40
codegen_flags: <defaults>
</compile_context>

<pallas_src>
import functools

import jax
import jax.numpy as jnp
from jax import lax
from jax.experimental import pallas as pl
from jax.experimental.pallas import tpu as pltpu


# ----------------------------- in-kernel helpers ----------------------------

def _gelu(x):
    # tanh-approximation GELU (matches the repo's custom GELU class).
    c = 0.7978845608028654  # sqrt(2/pi)
    return 0.5 * x * (1.0 + jnp.tanh(c * (x + 0.044715 * x * x * x)))


def _sigmoid(y):
    # numerically stable sigmoid; the reciprocal runs on the EUP (approx slot).
    e = jnp.exp(-jnp.abs(y))
    r = pl.reciprocal(1.0 + e, approx=True)
    s = jnp.where(y >= 0.0, r, e * r)
    # approx reciprocal may overshoot 1.0 by ~1e-4; clamp to the sigmoid range.
    return jnp.minimum(s, 1.0)


def _batchnorm_grouped(x, avg_m, gamma_t, beta_t, eps):
    """BatchNorm2d (training-mode batch statistics) on x:(rows, G*C).

    Columns are ordered (spatial-group, channel).  Per-channel statistics are
    reductions over all rows AND the G column groups — exactly the (batch,H,W)
    reduction torch.nn.BatchNorm2d performs (biased variance).  The group
    average + re-tiling is done with one small MXU dot against the host-packed
    averaging matrix `avg_m` (entries 0 / 1/G, exact in bf16) instead of G lane
    slices + concats.  gamma_t / beta_t are pre-tiled to (1, G*C) host-side.
    """
    f32, bf16 = jnp.float32, jnp.bfloat16
    col_mean = jnp.mean(x, axis=0, keepdims=True)                     # (1, G*C)
    mean_t = jnp.dot(col_mean.astype(bf16), avg_m, preferred_element_type=f32)
    centered = x - mean_t
    col_var = jnp.mean(centered * centered, axis=0, keepdims=True)
    var_t = jnp.dot(col_var.astype(bf16), avg_m, preferred_element_type=f32)
    return centered * (gamma_t * lax.rsqrt(var_t + eps)) + beta_t


# ------------------------------- fused kernel -------------------------------

def _decoder_kernel(zin_ref, wpk_ref, aux_ref, out_ref, *,
                    Kfc, C3, N1, N2, N3,
                    o_stk, o_w1, o_bd2, o_bd3, o_m1, o_m2, eps):
    f32, bf16 = jnp.float32, jnp.bfloat16

    # ---- bf16 weights, loaded from the packed VMEM block at point of use ----
    w_stk = wpk_ref[o_stk:o_stk + Kfc, 0:C3]      # fused Linear+UnFlatten weight
    w1 = wpk_ref[o_w1:o_w1 + C3, 0:N1]            # ConvT1 (stride == kernel)
    bd2 = wpk_ref[o_bd2:o_bd2 + N1, 0:N2]         # ConvT2, block-diagonal
    bd3 = wpk_ref[o_bd3:o_bd3 + N2, 0:N3]         # ConvT3, block-diag + out perm
    m1 = wpk_ref[o_m1:o_m1 + N1, 0:N1]            # BN1 group-averaging matrix
    m2 = wpk_ref[o_m2:o_m2 + N2, 0:N2]            # BN2 group-averaging matrix

    # ---- f32 epilogue params (biases / BN affine, pre-tiled over groups) ----
    b1t = aux_ref[0:1, 0:N1]
    b2t = aux_ref[1:2, 0:N2]
    b3t = aux_ref[2:3, 0:N3]
    g1t = aux_ref[3:4, 0:N1]
    be1t = aux_ref[4:5, 0:N1]
    g2t = aux_ref[5:6, 0:N2]
    be2t = aux_ref[6:7, 0:N2]

    # ---- Linear + bias + UnFlatten fused into ONE MXU dot + GELU ------------
    # zin rows are (batch, 4x4-pixel); the per-block ones-column folds the bias.
    x1 = _gelu(jnp.dot(zin_ref[...], w_stk, preferred_element_type=f32))  # (R, C3)

    # ---- ConvT1 (stride == kernel) as one matmul + GELU + BatchNorm ---------
    y1 = jnp.dot(x1.astype(bf16), w1, preferred_element_type=f32) + b1t
    x2 = _batchnorm_grouped(_gelu(y1), m1, g1t, be1t, eps)                # (R, N1)

    # ---- ConvT2 via block-diagonal weight + GELU + BatchNorm ----------------
    y2 = jnp.dot(x2.astype(bf16), bd2, preferred_element_type=f32) + b2t
    x3 = _batchnorm_grouped(_gelu(y2), m2, g2t, be2t, eps)                # (R, N2)

    # ---- ConvT3 (columns pre-permuted to final layout) + Sigmoid ------------
    y3 = jnp.dot(x3.astype(bf16), bd3, preferred_element_type=f32) + b3t
    out_ref[...] = _sigmoid(y3)                   # (R, N3): lane-dense store


# --------------------------- host-side param packing ------------------------

def pack_params(p):
    """One-time host-side permutation / packing of parameters for the kernel."""
    C3, C4, C5, C6 = p["channels"]
    k = p["k"]
    G = k * k
    L, hidden = p["fc_w"].shape
    H0, W0 = 4, 4                       # UnFlatten(channels, 4, 4) in the module
    P0 = H0 * W0
    assert hidden == C3 * P0

    # Fused Linear+UnFlatten weight: torch hidden order is (c3, h0, w0); block
    # p of w_stk holds the (L, C3) slice for pixel p, with the bias as the
    # block's last row (matched by the ones-column in zin).
    wfc = p["fc_w"].reshape(L, C3, H0, W0).transpose(2, 3, 0, 1).reshape(P0, L, C3)
    bfc = p["fc_b"].reshape(C3, H0, W0).transpose(1, 2, 0).reshape(P0, 1, C3)
    w_stk = jnp.concatenate([wfc, bfc], axis=1).reshape(P0 * (L + 1), C3)
    Kfc = P0 * (L + 1)

    # ConvT(k==s) weights (Cin, Cout, kH, kW) -> (Cin, k*k*Cout), cols (kh, kw, co).
    def conv_mat(w):
        cin, cout = w.shape[0], w.shape[1]
        return jnp.transpose(w, (0, 2, 3, 1)).reshape(cin, G * cout)

    w1m = conv_mat(p["dc1_w"])          # (C3, G*C4)
    w2m = conv_mat(p["dc2_w"])          # (C4, G*C5)
    w3m = conv_mat(p["dc3_w"])          # (C5, G*C6)

    def block_diag(w, n):
        cin, ncol = w.shape
        bd = jnp.zeros((n * cin, n * ncol), w.dtype)
        for i in range(n):
            bd = bd.at[i * cin:(i + 1) * cin, i * ncol:(i + 1) * ncol].set(w)
        return bd

    bd2 = block_diag(w2m, G)            # (G*C4,   G*G*C5)
    bd3 = block_diag(w3m, G * G)        # (G*G*C5, G*G*G*C6)

    N1, N2, N3 = G * C4, G * G * C5, G * G * G * C6

    # Fold the spatial output permutation into ConvT3's columns: from
    # (kh1, kw1, kh2, kw2, kh3, kw3, c6) to (c6, kh1, kh2, kh3, kw1, kw2, kw3)
    # so the wrapper only needs reshape -> transpose -> reshape to emit NCHW.
    perm = (jnp.arange(N3).reshape(k, k, k, k, k, k, C6)
            .transpose(6, 0, 2, 4, 1, 3, 5).reshape(-1))
    bd3 = bd3[:, perm]
    b3t = jnp.tile(p["dc3_b"], (G * G * G,))[perm]

    # BN group-averaging matrices (entries 0 or 1/G -> exact in bf16).
    def group_avg_matrix(groups, c):
        ch = jnp.arange(groups * c) % c
        return (ch[:, None] == ch[None, :]).astype(jnp.float32) / groups

    m1 = group_avg_matrix(G, C4)        # (N1, N1)
    m2 = group_avg_matrix(G * G, C5)    # (N2, N2)

    width = ((max(C3, N1, N2, N3) + 127) // 128) * 128   # lane-aligned pack width

    def rup8(x):
        return ((x + 7) // 8) * 8

    o_stk = 0
    o_w1 = o_stk + rup8(Kfc)
    o_bd2 = o_w1 + rup8(C3)
    o_bd3 = o_bd2 + rup8(N1)
    o_m1 = o_bd3 + rup8(N2)
    o_m2 = o_m1 + rup8(N1)
    rows = o_m2 + rup8(N2)

    wpk = jnp.zeros((rows, width), jnp.bfloat16)
    wpk = wpk.at[o_stk:o_stk + Kfc, :C3].set(w_stk.astype(jnp.bfloat16))
    wpk = wpk.at[o_w1:o_w1 + C3, :N1].set(w1m.astype(jnp.bfloat16))
    wpk = wpk.at[o_bd2:o_bd2 + N1, :N2].set(bd2.astype(jnp.bfloat16))
    wpk = wpk.at[o_bd3:o_bd3 + N2, :N3].set(bd3.astype(jnp.bfloat16))
    wpk = wpk.at[o_m1:o_m1 + N1, :N1].set(m1.astype(jnp.bfloat16))
    wpk = wpk.at[o_m2:o_m2 + N2, :N2].set(m2.astype(jnp.bfloat16))

    aux = jnp.zeros((8, width), jnp.float32)
    aux = aux.at[0, :N1].set(jnp.tile(p["dc1_b"], (G,)))
    aux = aux.at[1, :N2].set(jnp.tile(p["dc2_b"], (G * G,)))
    aux = aux.at[2, :N3].set(b3t)
    aux = aux.at[3, :N1].set(jnp.tile(p["bn1_g"], (G,)))
    aux = aux.at[4, :N1].set(jnp.tile(p["bn1_b"], (G,)))
    aux = aux.at[5, :N2].set(jnp.tile(p["bn2_g"], (G * G,)))
    aux = aux.at[6, :N2].set(jnp.tile(p["bn2_b"], (G * G,)))

    cfg = dict(L=L, Kfc=Kfc, C3=C3, C4=C4, C5=C5, C6=C6, G=G, k=k,
               H0=H0, W0=W0, P0=P0, N1=N1, N2=N2, N3=N3,
               o_stk=o_stk, o_w1=o_w1, o_bd2=o_bd2, o_bd3=o_bd3,
               o_m1=o_m1, o_m2=o_m2, eps=1e-5)
    return {"wpk": wpk, "aux": aux, "cfg": cfg}


# ------------------------------- public wrapper ------------------------------

def generative_network_forward(z, packed):
    """z:(B, latent) -> x_reconstructed:(B, C6, 32, 32) NCHW float32."""
    cfg = packed["cfg"]
    B = z.shape[0]
    k = cfg["k"]
    L, C3, N1, N2, N3 = cfg["L"], cfg["C3"], cfg["N1"], cfg["N2"], cfg["N3"]
    C6, H0, W0, P0, Kfc = cfg["C6"], cfg["H0"], cfg["W0"], cfg["P0"], cfg["Kfc"]
    R = P0 * B

    # Block-structured bf16 input slab: row b*P0 + p holds [z[b], 1] in the p-th
    # column block, so Linear + bias + UnFlatten collapse to ONE in-kernel dot.
    zaug = jnp.concatenate([z, jnp.ones((B, 1), z.dtype)], axis=1).astype(jnp.bfloat16)
    eye_p = jnp.eye(P0, dtype=jnp.bfloat16)
    zin = (zaug[:, None, None, :] * eye_p[None, :, :, None]).reshape(R, Kfc)

    kernel = functools.partial(
        _decoder_kernel,
        **{name: cfg[name] for name in (
            "Kfc", "C3", "N1", "N2", "N3",
            "o_stk", "o_w1", "o_bd2", "o_bd3", "o_m1", "o_m2", "eps")})

    wpk, aux = packed["wpk"], packed["aux"]
    flops = 2 * R * (Kfc * C3 + C3 * N1 + N1 * N2 + N2 * N3) + 4 * (N1 * N1 + N2 * N2)
    transcendentals = R * (C3 + N1 + N2 + N3)
    bytes_accessed = zin.size * 2 + wpk.size * 2 + aux.size * 4 + R * N3 * 4

    y = pl.pallas_call(
        kernel,
        out_shape=jax.ShapeDtypeStruct((R, N3), jnp.float32),
        in_specs=[
            pl.BlockSpec(zin.shape, lambda: (0, 0)),
            pl.BlockSpec(wpk.shape, lambda: (0, 0)),
            pl.BlockSpec(aux.shape, lambda: (0, 0)),
        ],
        out_specs=pl.BlockSpec((R, N3), lambda: (0, 0)),
        compiler_params=pltpu.CompilerParams(vmem_limit_bytes=32 * 1024 * 1024),
        cost_estimate=pl.CostEstimate(flops=int(flops),
                                      transcendentals=int(transcendentals),
                                      bytes_accessed=int(bytes_accessed)),
    )(zin, wpk, aux)

    # Kernel output: rows (b, h0, w0); cols (c6, kh1, kh2, kh3, kw1, kw2, kw3)
    # (column perm already folded into ConvT3 host-side) -> single
    # reshape / transpose / reshape to NCHW.
    y = y.reshape(B, H0, W0, C6, k, k, k, k, k, k)
    y = jnp.transpose(y, (0, 3, 1, 4, 5, 6, 2, 7, 8, 9))
    return y.reshape(B, C6, H0 * k ** 3, W0 * k ** 3)


# ------------------------------- parameter init ------------------------------

def init_params(key, latent_dim=16, channels=(8, 8, 8, 4), k=2):
    C3, C4, C5, C6 = channels
    hidden_dim = C3 * 4 * 4
    ks = jax.random.split(key, 8)
    s = 0.1
    return {
        "channels": channels,
        "k": k,
        "fc_w": s * jax.random.normal(ks[0], (latent_dim, hidden_dim), jnp.float32),
        "fc_b": jnp.zeros((hidden_dim,), jnp.float32),
        # PyTorch ConvTranspose2d weight layout: (Cin, Cout, kH, kW)
        "dc1_w": s * jax.random.normal(ks[1], (C3, C4, k, k), jnp.float32),
        "dc1_b": 0.01 * jax.random.normal(ks[2], (C4,), jnp.float32),
        "dc2_w": s * jax.random.normal(ks[3], (C4, C5, k, k), jnp.float32),
        "dc2_b": 0.01 * jax.random.normal(ks[4], (C5,), jnp.float32),
        "dc3_w": s * jax.random.normal(ks[5], (C5, C6, k, k), jnp.float32),
        "dc3_b": 0.01 * jax.random.normal(ks[6], (C6,), jnp.float32),
        # BatchNorm affine params (torch default init: gamma=1, beta=0)
        "bn1_g": jnp.ones((C4,), jnp.float32),
        "bn1_b": jnp.zeros((C4,), jnp.float32),
        "bn2_g": jnp.ones((C5,), jnp.float32),
        "bn2_b": jnp.zeros((C5,), jnp.float32),
    }


# ------------------------------ pure-JAX reference ---------------------------

def _reference_forward(z, p):
    """Plain XLA reference in NCHW, mirroring the torch module semantics."""
    C3, C4, C5, C6 = p["channels"]
    k = p["k"]
    B = z.shape[0]

    def conv_t(x, w, b):                      # stride == kernel_size, no padding
        Bb, Cin, H, W = x.shape
        y = jnp.einsum("bihw,iokl->bohkwl", x, w)
        y = y.reshape(Bb, w.shape[1], H * k, W * k)
        return y + b[None, :, None, None]

    def bnorm(x, g, b):
        m = jnp.mean(x, axis=(0, 2, 3), keepdims=True)
        v = jnp.mean((x - m) ** 2, axis=(0, 2, 3), keepdims=True)
        return (x - m) / jnp.sqrt(v + 1e-5) * g[None, :, None, None] \
            + b[None, :, None, None]

    h = _gelu(z @ p["fc_w"] + p["fc_b"])
    x = h.reshape(B, C3, 4, 4)
    x = bnorm(_gelu(conv_t(x, p["dc1_w"], p["dc1_b"])), p["bn1_g"], p["bn1_b"])
    x = bnorm(_gelu(conv_t(x, p["dc2_w"], p["dc2_b"])), p["bn2_g"], p["bn2_b"])
    return jax.nn.sigmoid(conv_t(x, p["dc3_w"], p["dc3_b"]))


# ----------------------------------- main ------------------------------------

if __name__ == "__main__":
    key = jax.random.PRNGKey(0)
    k_param, k_z = jax.random.split(key)

    B, latent_dim = 2, 16
    params = init_params(k_param, latent_dim=latent_dim, channels=(8, 8, 8, 4), k=2)
    packed = pack_params(params)

    z = jax.random.normal(k_z, (B, latent_dim), jnp.float32)

    fwd = jax.jit(lambda zz: generative_network_forward(zz, packed))
    out = jax.block_until_ready(fwd(z))

    assert out.shape == (B, 4, 32, 32), out.shape
    assert out.dtype == jnp.float32
    assert bool(jnp.all(jnp.isfinite(out)))
    assert bool(jnp.all((out >= 0.0) & (out <= 1.0)))   # sigmoid output range

    # Numerical check vs. pure-JAX reference (loose tol: bf16 MXU operands).
    ref = _reference_forward(z, params)
    max_err = float(jnp.max(jnp.abs(out - ref)))
    assert max_err < 5e-2, max_err

    print("KERNEL_OK")
</pallas_src>

<mosaic_0001>
module attributes {stable_mosaic.version = 11 : i64} {
  func.func @_decoder_kernel(%arg0: memref<32x272xbf16, #tpu.memory_space<vmem>>, %arg1: memref<600x256xbf16, #tpu.memory_space<vmem>>, %arg2: memref<8x256xf32, #tpu.memory_space<vmem>>, %arg3: memref<32x256xf32, #tpu.memory_space<vmem>>) attributes {dimension_semantics = [], scalar_prefetch = 0 : i64, scratch_operands = 0 : i64, tpu.core_type = #tpu.core_type<tc>} {
    %c0 = arith.constant 0 : index
    %c0_0 = arith.constant 0 : index
    %0 = vector.load %arg1[%c0, %c0_0] : memref<600x256xbf16, #tpu.memory_space<vmem>>, vector<272x8xbf16>
    %c272 = arith.constant 272 : index
    %c0_1 = arith.constant 0 : index
    %1 = vector.load %arg1[%c272, %c0_1] : memref<600x256xbf16, #tpu.memory_space<vmem>>, vector<8x32xbf16>
    %c280 = arith.constant 280 : index
    %c0_2 = arith.constant 0 : index
    %2 = vector.load %arg1[%c280, %c0_2] : memref<600x256xbf16, #tpu.memory_space<vmem>>, vector<32x128xbf16>
    %c312 = arith.constant 312 : index
    %c0_3 = arith.constant 0 : index
    %3 = vector.load %arg1[%c312, %c0_3] : memref<600x256xbf16, #tpu.memory_space<vmem>>, vector<128x256xbf16>
    %c440 = arith.constant 440 : index
    %c0_4 = arith.constant 0 : index
    %4 = vector.load %arg1[%c440, %c0_4] : memref<600x256xbf16, #tpu.memory_space<vmem>>, vector<32x32xbf16>
    %c472 = arith.constant 472 : index
    %c0_5 = arith.constant 0 : index
    %5 = vector.load %arg1[%c472, %c0_5] : memref<600x256xbf16, #tpu.memory_space<vmem>>, vector<128x128xbf16>
    %c0_6 = arith.constant 0 : index
    %c0_7 = arith.constant 0 : index
    %6 = vector.load %arg2[%c0_6, %c0_7] : memref<8x256xf32, #tpu.memory_space<vmem>>, vector<1x32xf32>
    %c1 = arith.constant 1 : index
    %c0_8 = arith.constant 0 : index
    %7 = vector.load %arg2[%c1, %c0_8] : memref<8x256xf32, #tpu.memory_space<vmem>>, vector<1x128xf32>
    %c2 = arith.constant 2 : index
    %c0_9 = arith.constant 0 : index
    %8 = vector.load %arg2[%c2, %c0_9] : memref<8x256xf32, #tpu.memory_space<vmem>>, vector<1x256xf32>
    %c3 = arith.constant 3 : index
    %c0_10 = arith.constant 0 : index
    %9 = vector.load %arg2[%c3, %c0_10] : memref<8x256xf32, #tpu.memory_space<vmem>>, vector<1x32xf32>
    %c4 = arith.constant 4 : index
    %c0_11 = arith.constant 0 : index
    %10 = vector.load %arg2[%c4, %c0_11] : memref<8x256xf32, #tpu.memory_space<vmem>>, vector<1x32xf32>
    %c5 = arith.constant 5 : index
    %c0_12 = arith.constant 0 : index
    %11 = vector.load %arg2[%c5, %c0_12] : memref<8x256xf32, #tpu.memory_space<vmem>>, vector<1x128xf32>
    %c6 = arith.constant 6 : index
    %c0_13 = arith.constant 0 : index
    %12 = vector.load %arg2[%c6, %c0_13] : memref<8x256xf32, #tpu.memory_space<vmem>>, vector<1x128xf32>
    %c0_14 = arith.constant 0 : index
    %c0_15 = arith.constant 0 : index
    %13 = vector.load %arg0[%c0_14, %c0_15] : memref<32x272xbf16, #tpu.memory_space<vmem>>, vector<32x272xbf16>
    %cst = arith.constant dense<0.000000e+00> : vector<32x8xf32>
    %14 = tpu.matmul %13, %0, %cst {dimension_numbers = #tpu.dot_dimension_numbers<[1], [0], [0], [1], [0, 0, 1, 1], [], []>} : vector<32x272xbf16>, vector<272x8xbf16>, vector<32x8xf32> -> vector<32x8xf32>
    %cst_16 = arith.constant 5.000000e-01 : f32
    %15 = vector.broadcast %cst_16 : f32 to vector<32x8xf32>
    %16 = arith.mulf %15, %14 : vector<32x8xf32>
    %cst_17 = arith.constant 4.471500e-02 : f32
    %17 = vector.broadcast %cst_17 : f32 to vector<32x8xf32>
    %18 = arith.mulf %17, %14 : vector<32x8xf32>
    %19 = arith.mulf %18, %14 : vector<32x8xf32>
    %20 = arith.mulf %19, %14 : vector<32x8xf32>
    %21 = arith.addf %14, %20 : vector<32x8xf32>
    %cst_18 = arith.constant 0.797884583 : f32
    %22 = vector.broadcast %cst_18 : f32 to vector<32x8xf32>
    %23 = arith.mulf %22, %21 : vector<32x8xf32>
    %24 = math.tanh %23 : vector<32x8xf32>
    %cst_19 = arith.constant 1.000000e+00 : f32
    %25 = vector.broadcast %cst_19 : f32 to vector<32x8xf32>
    %26 = arith.addf %25, %24 : vector<32x8xf32>
    %27 = arith.mulf %16, %26 : vector<32x8xf32>
    %28 = arith.truncf %27 : vector<32x8xf32> to vector<32x8xbf16>
    %cst_20 = arith.constant dense<0.000000e+00> : vector<32x32xf32>
    %29 = tpu.matmul %28, %1, %cst_20 {dimension_numbers = #tpu.dot_dimension_numbers<[1], [0], [0], [1], [0, 0, 1, 1], [], []>} : vector<32x8xbf16>, vector<8x32xbf16>, vector<32x32xf32> -> vector<32x32xf32>
    %30 = vector.broadcast %6 : vector<1x32xf32> to vector<32x32xf32>
    %31 = arith.addf %29, %30 : vector<32x32xf32>
    %cst_21 = arith.constant 5.000000e-01 : f32
    %32 = vector.broadcast %cst_21 : f32 to vector<32x32xf32>
    %33 = arith.mulf %32, %31 : vector<32x32xf32>
    %cst_22 = arith.constant 4.471500e-02 : f32
    %34 = vector.broadcast %cst_22 : f32 to vector<32x32xf32>
    %35 = arith.mulf %34, %31 : vector<32x32xf32>
    %36 = arith.mulf %35, %31 : vector<32x32xf32>
    %37 = arith.mulf %36, %31 : vector<32x32xf32>
    %38 = arith.addf %31, %37 : vector<32x32xf32>
    %cst_23 = arith.constant 0.797884583 : f32
    %39 = vector.broadcast %cst_23 : f32 to vector<32x32xf32>
    %40 = arith.mulf %39, %38 : vector<32x32xf32>
    %41 = math.tanh %40 : vector<32x32xf32>
    %cst_24 = arith.constant 1.000000e+00 : f32
    %42 = vector.broadcast %cst_24 : f32 to vector<32x32xf32>
    %43 = arith.addf %42, %41 : vector<32x32xf32>
    %44 = arith.mulf %33, %43 : vector<32x32xf32>
    %cst_25 = arith.constant dense<0.000000e+00> : vector<32xf32>
    %45 = vector.multi_reduction <add>, %44, %cst_25 [0] : vector<32x32xf32> to vector<32xf32>
    %46 = vector.shape_cast %45 : vector<32xf32> to vector<1x32xf32>
    %cst_26 = arith.constant 3.200000e+01 : f32
    %47 = vector.broadcast %cst_26 : f32 to vector<1x32xf32>
    %48 = arith.divf %46, %47 : vector<1x32xf32>
    %49 = arith.truncf %48 : vector<1x32xf32> to vector<1x32xbf16>
    %cst_27 = arith.constant dense<0.000000e+00> : vector<1x32xf32>
    %50 = tpu.matmul %49, %4, %cst_27 {dimension_numbers = #tpu.dot_dimension_numbers<[1], [0], [0], [1], [0, 0, 1, 1], [], []>} : vector<1x32xbf16>, vector<32x32xbf16>, vector<1x32xf32> -> vector<1x32xf32>
    %51 = vector.broadcast %50 : vector<1x32xf32> to vector<32x32xf32>
    %52 = arith.subf %44, %51 : vector<32x32xf32>
    %53 = arith.mulf %52, %52 : vector<32x32xf32>
    %cst_28 = arith.constant dense<0.000000e+00> : vector<32xf32>
    %54 = vector.multi_reduction <add>, %53, %cst_28 [0] : vector<32x32xf32> to vector<32xf32>
    %55 = vector.shape_cast %54 : vector<32xf32> to vector<1x32xf32>
    %cst_29 = arith.constant 3.200000e+01 : f32
    %56 = vector.broadcast %cst_29 : f32 to vector<1x32xf32>
    %57 = arith.divf %55, %56 : vector<1x32xf32>
    %58 = arith.truncf %57 : vector<1x32xf32> to vector<1x32xbf16>
    %cst_30 = arith.constant dense<0.000000e+00> : vector<1x32xf32>
    %59 = tpu.matmul %58, %4, %cst_30 {dimension_numbers = #tpu.dot_dimension_numbers<[1], [0], [0], [1], [0, 0, 1, 1], [], []>} : vector<1x32xbf16>, vector<32x32xbf16>, vector<1x32xf32> -> vector<1x32xf32>
    %cst_31 = arith.constant 9.99999974E-6 : f32
    %60 = vector.broadcast %cst_31 : f32 to vector<1x32xf32>
    %61 = arith.addf %59, %60 : vector<1x32xf32>
    %62 = math.rsqrt %61 : vector<1x32xf32>
    %63 = arith.mulf %9, %62 : vector<1x32xf32>
    %64 = vector.broadcast %63 : vector<1x32xf32> to vector<32x32xf32>
    %65 = arith.mulf %52, %64 : vector<32x32xf32>
    %66 = vector.broadcast %10 : vector<1x32xf32> to vector<32x32xf32>
    %67 = arith.addf %65, %66 : vector<32x32xf32>
    %68 = arith.truncf %67 : vector<32x32xf32> to vector<32x32xbf16>
    %cst_32 = arith.constant dense<0.000000e+00> : vector<32x128xf32>
    %69 = tpu.matmul %68, %2, %cst_32 {dimension_numbers = #tpu.dot_dimension_numbers<[1], [0], [0], [1], [0, 0, 1, 1], [], []>} : vector<32x32xbf16>, vector<32x128xbf16>, vector<32x128xf32> -> vector<32x128xf32>
    %70 = vector.broadcast %7 : vector<1x128xf32> to vector<32x128xf32>
    %71 = arith.addf %69, %70 : vector<32x128xf32>
    %cst_33 = arith.constant 5.000000e-01 : f32
    %72 = vector.broadcast %cst_33 : f32 to vector<32x128xf32>
    %73 = arith.mulf %72, %71 : vector<32x128xf32>
    %cst_34 = arith.constant 4.471500e-02 : f32
    %74 = vector.broadcast %cst_34 : f32 to vector<32x128xf32>
    %75 = arith.mulf %74, %71 : vector<32x128xf32>
    %76 = arith.mulf %75, %71 : vector<32x128xf32>
    %77 = arith.mulf %76, %71 : vector<32x128xf32>
    %78 = arith.addf %71, %77 : vector<32x128xf32>
    %cst_35 = arith.constant 0.797884583 : f32
    %79 = vector.broadcast %cst_35 : f32 to vector<32x128xf32>
    %80 = arith.mulf %79, %78 : vector<32x128xf32>
    %81 = math.tanh %80 : vector<32x128xf32>
    %cst_36 = arith.constant 1.000000e+00 : f32
    %82 = vector.broadcast %cst_36 : f32 to vector<32x128xf32>
    %83 = arith.addf %82, %81 : vector<32x128xf32>
    %84 = arith.mulf %73, %83 : vector<32x128xf32>
    %cst_37 = arith.constant dense<0.000000e+00> : vector<128xf32>
    %85 = vector.multi_reduction <add>, %84, %cst_37 [0] : vector<32x128xf32> to vector<128xf32>
    %86 = vector.shape_cast %85 : vector<128xf32> to vector<1x128xf32>
    %cst_38 = arith.constant 3.200000e+01 : f32
    %87 = vector.broadcast %cst_38 : f32 to vector<1x128xf32>
    %88 = arith.divf %86, %87 : vector<1x128xf32>
    %89 = arith.truncf %88 : vector<1x128xf32> to vector<1x128xbf16>
    %cst_39 = arith.constant dense<0.000000e+00> : vector<1x128xf32>
    %90 = tpu.matmul %89, %5, %cst_39 {dimension_numbers = #tpu.dot_dimension_numbers<[1], [0], [0], [1], [0, 0, 1, 1], [], []>} : vector<1x128xbf16>, vector<128x128xbf16>, vector<1x128xf32> -> vector<1x128xf32>
    %91 = vector.broadcast %90 : vector<1x128xf32> to vector<32x128xf32>
    %92 = arith.subf %84, %91 : vector<32x128xf32>
    %93 = arith.mulf %92, %92 : vector<32x128xf32>
    %cst_40 = arith.constant dense<0.000000e+00> : vector<128xf32>
    %94 = vector.multi_reduction <add>, %93, %cst_40 [0] : vector<32x128xf32> to vector<128xf32>
    %95 = vector.shape_cast %94 : vector<128xf32> to vector<1x128xf32>
    %cst_41 = arith.constant 3.200000e+01 : f32
    %96 = vector.broadcast %cst_41 : f32 to vector<1x128xf32>
    %97 = arith.divf %95, %96 : vector<1x128xf32>
    %98 = arith.truncf %97 : vector<1x128xf32> to vector<1x128xbf16>
    %cst_42 = arith.constant dense<0.000000e+00> : vector<1x128xf32>
    %99 = tpu.matmul %98, %5, %cst_42 {dimension_numbers = #tpu.dot_dimension_numbers<[1], [0], [0], [1], [0, 0, 1, 1], [], []>} : vector<1x128xbf16>, vector<128x128xbf16>, vector<1x128xf32> -> vector<1x128xf32>
    %cst_43 = arith.constant 9.99999974E-6 : f32
    %100 = vector.broadcast %cst_43 : f32 to vector<1x128xf32>
    %101 = arith.addf %99, %100 : vector<1x128xf32>
    %102 = math.rsqrt %101 : vector<1x128xf32>
    %103 = arith.mulf %11, %102 : vector<1x128xf32>
    %104 = vector.broadcast %103 : vector<1x128xf32> to vector<32x128xf32>
    %105 = arith.mulf %92, %104 : vector<32x128xf32>
    %106 = vector.broadcast %12 : vector<1x128xf32> to vector<32x128xf32>
    %107 = arith.addf %105, %106 : vector<32x128xf32>
    %108 = arith.truncf %107 : vector<32x128xf32> to vector<32x128xbf16>
    %cst_44 = arith.constant dense<0.000000e+00> : vector<32x256xf32>
    %109 = tpu.matmul %108, %3, %cst_44 {dimension_numbers = #tpu.dot_dimension_numbers<[1], [0], [0], [1], [0, 0, 1, 1], [], []>} : vector<32x128xbf16>, vector<128x256xbf16>, vector<32x256xf32> -> vector<32x256xf32>
    %110 = vector.broadcast %8 : vector<1x256xf32> to vector<32x256xf32>
    %111 = arith.addf %109, %110 : vector<32x256xf32>
    %112 = math.absf %111 : vector<32x256xf32>
    %cst_45 = arith.constant 0.000000e+00 : f32
    %113 = vector.broadcast %cst_45 : f32 to vector<32x256xf32>
    %114 = arith.subf %113, %112 : vector<32x256xf32>
    %115 = math.exp %114 : vector<32x256xf32>
    %cst_46 = arith.constant 1.000000e+00 : f32
    %116 = vector.broadcast %cst_46 : f32 to vector<32x256xf32>
    %117 = arith.addf %116, %115 : vector<32x256xf32>
    %118 = tpu.reciprocal %117 {approx = true} : vector<32x256xf32> -> vector<32x256xf32>
    %cst_47 = arith.constant 0.000000e+00 : f32
    %119 = vector.broadcast %cst_47 : f32 to vector<32x256xf32>
    %120 = arith.cmpf oge, %111, %119 : vector<32x256xf32>
    %121 = arith.mulf %115, %118 : vector<32x256xf32>
    %122 = arith.select %120, %118, %121 : vector<32x256xi1>, vector<32x256xf32>
    %cst_48 = arith.constant 1.000000e+00 : f32
    %123 = vector.broadcast %cst_48 : f32 to vector<32x256xf32>
    %124 = arith.minimumf %122, %123 : vector<32x256xf32>
    %c0_49 = arith.constant 0 : index
    %c0_50 = arith.constant 0 : index
    %125 = vector.load %arg3[%c0_49, %c0_50] : memref<32x256xf32, #tpu.memory_space<vmem>>, vector<32x256xf32>
    tpu.vector_store %arg3[%c0_49, %c0_50], %124 {strides = array<i32>} : memref<32x256xf32, #tpu.memory_space<vmem>>, vector<32x256xf32>,
    return
  }
}

</mosaic_0001>

<llo_original>
// kernel: _lambda_.1
$region0: #{_lambda_.1}
  #allocation0 [shape = 'u32[]', space=smem, size = 0x4, offset = 0x4, fixed_abs, tag = 'smem constant byte address 0x4 - core index']
  #allocation1 [shape = 'u32[144,128]{1,0:T(1,128)}', space=vmem, size = 0x12000, scoped, tag = 'internal scratch']
  %s0 = inlined_call_operand.vmem [shape: bf16[32,272], index: 0, kind: input, shape index: {}]
  %s1 = inlined_call_operand.hbm [shape: bf16[600,256], index: 1, kind: input, shape index: {}]
  %s2 = inlined_call_operand.vmem [shape: f32[8,256], index: 2, kind: input, shape index: {}]
  %s3 = inlined_call_operand.vmem [shape: f32[32,256], index: 3, kind: output, shape index: {}]
  %s4 = sld [smem:[#allocation0]]
  $region26: #{_lambda_.1} parent=0
    _
  %s6 = ssub.s32 1, %s4
  %s7 = scalar_select 0, %s6, %s4
  $region1: #{_lambda_.1} parent=0
    #allocation2 [shape = 'u8[307200]{0}', space=vmem, size = 0x4b000, scoped, tag = 'input window, operand 1, single buffered']
    #allocation3 [shape = 's32[1]{0}', space=sflag, size = 0x4, scoped, tag = 'scoped memory for _lambda_.1']
    %8 = vsyncpa [#allocation3], 0
    // Predicated region
    $region2: #{_lambda_.1} parent=1 // pred_check
      _
    $region3: #{_lambda_.1} parent=1 // pred_check_branch
      %10 = sbr.rel (0) target = $region5
    $region4: #{_lambda_.1} parent=1 // pred_region
      _
    $region5: #{_lambda_.1} parent=1 // pred_fallthru
      _
    // Predicated region
    $region6: #{_lambda_.1} parent=1 // pred_check
      _
    $region7: #{_lambda_.1} parent=1 // pred_check_branch
      %12 = sbr.rel (0) target = $region9
    $region8: #{_lambda_.1} parent=1 // pred_region
      %s14 = ssub.s32 9600, 9600
      %15 = vsyncadd [#allocation3], %s14
      %s16 = sshll.u32 [#allocation2], 4
      %s17 = int_to_ptr.vmem [resolvable:$true] %s16
      %22 = dma.hbm_to_vmem [thread:$0]  %s1, 9600, %s17, [#allocation3], 128, 128, 8
    $region9: #{_lambda_.1} parent=1 // pred_fallthru
      _
    // Predicated region
    $region10: #{_lambda_.1} parent=1 // pred_check
      _
    $region11: #{_lambda_.1} parent=1 // pred_check_branch
      %24 = sbr.rel (0) target = $region13
    $region12: #{_lambda_.1} parent=1 // pred_region
      _
    $region13: #{_lambda_.1} parent=1 // pred_fallthru
      _
    // Predicated region
    $region14: #{_lambda_.1} parent=1 // pred_check
      _
    $region15: #{_lambda_.1} parent=1 // pred_check_branch
      %26 = sbr.rel (0) target = $region17
    $region16: #{_lambda_.1} parent=1 // pred_region
      %27 = dma.done [#allocation3], 9600
    $region17: #{_lambda_.1} parent=1 // pred_fallthru
      _
    %v29 = vld [vmem:[#allocation2] sm:$0xf]
    %v30 = vld [vmem:[#allocation2 + $0x8] sm:$0xf]
    %v31 = vld [vmem:[#allocation2 + $0x10] sm:$0xf]
    %v32 = vld [vmem:[#allocation2 + $0x18] sm:$0xf]
    %v33 = vld [vmem:[#allocation2 + $0x20] sm:$0xf]
    %v34 = vld [vmem:[#allocation2 + $0x28] sm:$0xf]
    %v35 = vld [vmem:[#allocation2 + $0x30] sm:$0xf]
    %v36 = vld [vmem:[#allocation2 + $0x38] sm:$0xf]
    %v37 = vld [vmem:[#allocation2 + $0x40] sm:$0xf]
    %v38 = vld [vmem:[#allocation2 + $0x48] sm:$0xf]
    %v39 = vld [vmem:[#allocation2 + $0x50] sm:$0xf]
    %v40 = vld [vmem:[#allocation2 + $0x58] sm:$0xf]
    %v41 = vld [vmem:[#allocation2 + $0x60] sm:$0xf]
    %v42 = vld [vmem:[#allocation2 + $0x68] sm:$0xf]
    %v43 = vld [vmem:[#allocation2 + $0x70] sm:$0xf]
    %v44 = vld [vmem:[#allocation2 + $0x78] sm:$0xf]
    %v45 = vld [vmem:[#allocation2 + $0x80] sm:$0xf]
    %v46 = vld [vmem:[#allocation2 + $0x88] sm:$0xf]
    %v47 = vld [vmem:[#allocation2 + $0x90] sm:$0xf]
    %v48 = vld [vmem:[#allocation2 + $0x98] sm:$0xf]
    %v49 = vld [vmem:[#allocation2 + $0xa0] sm:$0xf]
    %v50 = vld [vmem:[#allocation2 + $0xa8] sm:$0xf]
    %v51 = vld [vmem:[#allocation2 + $0xb0] sm:$0xf]
    %v52 = vld [vmem:[#allocation2 + $0xb8] sm:$0xf]
    %v53 = vld [vmem:[#allocation2 + $0xc0] sm:$0xf]
    %v54 = vld [vmem:[#allocation2 + $0xc8] sm:$0xf]
    %v55 = vld [vmem:[#allocation2 + $0xd0] sm:$0xf]
    %v56 = vld [vmem:[#allocation2 + $0xd8] sm:$0xf]
    %v57 = vld [vmem:[#allocation2 + $0xe0] sm:$0xf]
    %v58 = vld [vmem:[#allocation2 + $0xe8] sm:$0xf]
    %v59 = vld [vmem:[#allocation2 + $0xf0] sm:$0xf]
    %v60 = vld [vmem:[#allocation2 + $0xf8] sm:$0xf]
    %v61 = vld [vmem:[#allocation2 + $0x100] sm:$0xf]
    %v62 = vld [vmem:[#allocation2 + $0x108] sm:$0xf]
    %v63 = vld [vmem:[#allocation2 + $0x110] sm:$0xf]
    %v64 = vld [vmem:[#allocation2 + $0x118] sm:$0xf]
    %v65 = vld [vmem:[#allocation2 + $0x120] sm:$0xf]
    %v66 = vld [vmem:[#allocation2 + $0x128] sm:$0xf]
    %v67 = vld [vmem:[#allocation2 + $0x130] sm:$0xf]
    %v68 = vld [vmem:[#allocation2 + $0x138] sm:$0xff]
    %v69 = vld [vmem:[#allocation2 + $0x140] sm:$0xff]
    %v70 = vld [vmem:[#allocation2 + $0x148] sm:$0xff]
    %v71 = vld [vmem:[#allocation2 + $0x150] sm:$0xff]
    %v72 = vld [vmem:[#allocation2 + $0x158] sm:$0xff]
    %v73 = vld [vmem:[#allocation2 + $0x160] sm:$0xff]
    %v74 = vld [vmem:[#allocation2 + $0x168] sm:$0xff]
    %v75 = vld [vmem:[#allocation2 + $0x170] sm:$0xff]
    %v76 = vld [vmem:[#allocation2 + $0x178] sm:$0xff]
    %v77 = vld [vmem:[#allocation2 + $0x180] sm:$0xff]
    %v78 = vld [vmem:[#allocation2 + $0x188] sm:$0xff]
    %v79 = vld [vmem:[#allocation2 + $0x190] sm:$0xff]
    %v80 = vld [vmem:[#allocation2 + $0x198] sm:$0xff]
    %v81 = vld [vmem:[#allocation2 + $0x1a0] sm:$0xff]
    %v82 = vld [vmem:[#allocation2 + $0x1a8] sm:$0xff]
    %v83 = vld [vmem:[#allocation2 + $0x1b0] sm:$0xff]
    %v84 = vld [vmem:[#allocation2 + $0x1b8] sm:$0xf]
    %v85 = vld [vmem:[#allocation2 + $0x1c0] sm:$0xf]
    %v86 = vld [vmem:[#allocation2 + $0x1c8] sm:$0xf]
    %v87 = vld [vmem:[#allocation2 + $0x1d0] sm:$0xf]
    %v88 = vld [vmem:[#allocation2 + $0x1d8] sm:$0xf]
    %v89 = vld [vmem:[#allocation2 + $0x1e0] sm:$0xf]
    %v90 = vld [vmem:[#allocation2 + $0x1e8] sm:$0xf]
    %v91 = vld [vmem:[#allocation2 + $0x1f0] sm:$0xf]
    %v92 = vld [vmem:[#allocation2 + $0x1f8] sm:$0xf]
    %v93 = vld [vmem:[#allocation2 + $0x200] sm:$0xf]
    %v94 = vld [vmem:[#allocation2 + $0x208] sm:$0xf]
    %v95 = vld [vmem:[#allocation2 + $0x210] sm:$0xf]
    %v96 = vld [vmem:[#allocation2 + $0x218] sm:$0xf]
    %v97 = vld [vmem:[#allocation2 + $0x220] sm:$0xf]
    %v98 = vld [vmem:[#allocation2 + $0x228] sm:$0xf]
    %v99 = vld [vmem:[#allocation2 + $0x230] sm:$0xf]
    %v100 = vld [vmem:[#allocation2 + $0x238] sm:$0xf]
    %v101 = vld [vmem:[#allocation2 + $0x240] sm:$0xf]
    %v102 = vld [vmem:[#allocation2 + $0x248] sm:$0xf]
    %v103 = vld [vmem:[#allocation2 + $0x250] sm:$0xf]
    %v104 = vld [vmem:[%s2] ss:$0 sm:$0xff]
    %v105 = vld [vmem:[%s2 + $0x1] ss:$0 sm:$0xff]
    %s106 = scalar_lea.vmem %s2, 2
    %v107 = vld [vmem:[%s106] ss:$8 sm:$0x3]
    %v108 = vld [vmem:[%s2 + $0x3] ss:$0 sm:$0xff]
    %v109 = vld [vmem:[%s2 + $0x4] ss:$0 sm:$0xff]
    %v110 = vld [vmem:[%s2 + $0x5] ss:$0 sm:$0xff]
    %v111 = vld [vmem:[%s2 + $0x6] ss:$0 sm:$0xff]
    %v112 = vld [vmem:[%s0] sm:$0xff]
    %v113 = vld [vmem:[%s0 + $0x8] sm:$0xf]
    %v114 = vld [vmem:[%s0 + $0xc] sm:$0xff]
    %v115 = vld [vmem:[%s0 + $0x14] sm:$0xf]
    %v116 = vld [vmem:[%s0 + $0x18] sm:$0xff]
    %v117 = vld [vmem:[%s0 + $0x20] sm:$0xf]
    %v118 = vld [vmem:[%s0 + $0x24] sm:$0xff]
    %v119 = vld [vmem:[%s0 + $0x2c] sm:$0xf]
    %v128 = vunpack.c.l.b16 %v112
    %v129 = vunpack.c.h.b16 %v112
    %v130 = vunpack.c.l.b16 %v113
    %v131 = vunpack.c.l.b16 %v114
    %v132 = vunpack.c.h.b16 %v114
    %v133 = vunpack.c.l.b16 %v115
    %v134 = vunpack.c.l.b16 %v116
    %v135 = vunpack.c.h.b16 %v116
    %v136 = vunpack.c.l.b16 %v117
    %v137 = vunpack.c.l.b16 %v118
    %v138 = vunpack.c.h.b16 %v118
    %v139 = vunpack.c.l.b16 %v119
    %v140 = vpack.c.b16 %v131, %v128
    %v141 = vpack.c.b16 %v132, %v129
    %v142 = vpack.c.b16 %v133, %v130
    %v143 = vpack.c.b16 %v137, %v134
    %v144 = vpack.c.b16 %v138, %v135
    %v145 = vpack.c.b16 %v139, %v136
    %v184 = vunpack.c.l.b16 %v29
    %v185 = vunpack.c.l.b16 %v30
    %v186 = vunpack.c.l.b16 %v31
    %v187 = vunpack.c.l.b16 %v32
    %v188 = vunpack.c.l.b16 %v33
    %v189 = vunpack.c.l.b16 %v34
    %v190 = vunpack.c.l.b16 %v35
    %v191 = vunpack.c.l.b16 %v36
    %v192 = vunpack.c.l.b16 %v37
    %v193 = vunpack.c.l.b16 %v38
    %v194 = vunpack.c.l.b16 %v39
    %v195 = vunpack.c.l.b16 %v40
    %v196 = vunpack.c.l.b16 %v41
    %v197 = vunpack.c.l.b16 %v42
    %v198 = vunpack.c.l.b16 %v43
    %v199 = vunpack.c.l.b16 %v44
    %v200 = vunpack.c.l.b16 %v45
    %v201 = vunpack.c.l.b16 %v46
    %v202 = vunpack.c.l.b16 %v47
    %v203 = vunpack.c.l.b16 %v48
    %v204 = vunpack.c.l.b16 %v49
    %v205 = vunpack.c.l.b16 %v50
    %v206 = vunpack.c.l.b16 %v51
    %v207 = vunpack.c.l.b16 %v52
    %v208 = vunpack.c.l.b16 %v53
    %v209 = vunpack.c.l.b16 %v54
    %v210 = vunpack.c.l.b16 %v55
    %v211 = vunpack.c.l.b16 %v56
    %v212 = vunpack.c.l.b16 %v57
    %v213 = vunpack.c.l.b16 %v58
    %v214 = vunpack.c.l.b16 %v59
    %v215 = vunpack.c.l.b16 %v60
    %v216 = vunpack.c.l.b16 %v61
    %v217 = vunpack.c.l.b16 %v62
    %v218 = vpack.c.b16 %v185, %v184
    %v219 = vpack.c.b16 %v187, %v186
    %v220 = vpack.c.b16 %v189, %v188
    %v221 = vpack.c.b16 %v191, %v190
    %v222 = vpack.c.b16 %v193, %v192
    %v223 = vpack.c.b16 %v195, %v194
    %v224 = vpack.c.b16 %v197, %v196
    %v225 = vpack.c.b16 %v199, %v198
    %v226 = vpack.c.b16 %v201, %v200
    %v227 = vpack.c.b16 %v203, %v202
    %v228 = vpack.c.b16 %v205, %v204
    %v229 = vpack.c.b16 %v207, %v206
    %v230 = vpack.c.b16 %v209, %v208
    %v231 = vpack.c.b16 %v211, %v210
    %v232 = vpack.c.b16 %v213, %v212
    %v233 = vpack.c.b16 %v215, %v214
    %v234 = vpack.c.b16 %v217, %v216
    %vm252 = vcmask 130048
    %v254 = vsel %vm252, %v142, 0
    %v257 = vsel %vm252, %v145, 0
    %259 = vmatprep.subr.bf16.mxu0 0
    %260 = vmatpush1.bf16.msra.mxu0 %v225
    %261 = vmatprep.subr.bf16.mxu0 0
    %262 = vmatpush1.bf16.msra.mxu0 %v224
    %263 = vmatprep.subr.bf16.mxu0 0
    %264 = vmatpush1.bf16.msra.mxu0 %v223
    %265 = vmatprep.subr.bf16.mxu0 0
    %266 = vmatpush1.bf16.msra.mxu0 %v222
    %267 = vmatprep.subr.bf16.mxu0 0
    %268 = vmatpush1.bf16.msra.mxu0 %v221
    %269 = vmatprep.subr.bf16.mxu0 0
    %270 = vmatpush1.bf16.msra.mxu0 %v220
    %271 = vmatprep.subr.bf16.mxu0 0
    %272 = vmatpush1.bf16.msra.mxu0 %v219
    %273 = vmatprep.subr.bf16.mxu0 0
    %274 = vmatpush1.bf16.msra.mxu0 %v218
    %275 = vmatprep.subr.bf16.mxu0 0
    %276 = vmatpush2.bf16.msra.mxu0 %v233
    %277 = vmatprep.subr.bf16.mxu0 0
    %278 = vmatpush2.bf16.msra.mxu0 %v232
    %279 = vmatprep.subr.bf16.mxu0 0
    %280 = vmatpush2.bf16.msra.mxu0 %v231
    %281 = vmatprep.subr.bf16.mxu0 0
    %282 = vmatpush2.bf16.msra.mxu0 %v230
    %283 = vmatprep.subr.bf16.mxu0 0
    %284 = vmatpush2.bf16.msra.mxu0 %v229
    %285 = vmatprep.subr.bf16.mxu0 0
    %286 = vmatpush2.bf16.msra.mxu0 %v228
    %287 = vmatprep.subr.bf16.mxu0 0
    %288 = vmatpush2.bf16.msra.mxu0 %v227
    %289 = vmatprep.subr.bf16.mxu0 0
    %290 = vmatpush2.bf16.msra.mxu0 %v226
    %291 = vmatprep.mubr.bf16.mxu0 %v141
    %292 = vmatmul.mubr.bf16.gmra.mxu0 %v140
    %v293 = vpop.f32.mrf.mxu0
    %v294 = vadd.f32 0.0, %v293
    %v295 = vpop.f32.mrf.mxu0
    %v296 = vpop.f32.mrf.mxu0
    %v297 = vadd.f32 0.0, %v296
    %v298 = vpop.f32.mrf.mxu0
    %299 = vmatprep.mubr.bf16.mxu0 %v144
    %300 = vmatmul.mubr.bf16.gmra.mxu0 %v143
    %v301 = vpop.f32.mrf.mxu0
    %v302 = vadd.f32 0.0, %v301
    %v303 = vpop.f32.mrf.mxu0
    %v304 = vpop.f32.mrf.mxu0
    %v305 = vadd.f32 0.0, %v304
    %v306 = vpop.f32.mrf.mxu0
    %307 = vdwg.mxu0
    %308 = vmatprep.subr.bf16.mxu0 0
    %309 = vmatpush1.bf16.msra.mxu0 0
    %310 = vmatprep.subr.bf16.mxu0 0
    %311 = vmatpush1.bf16.msra.mxu0 0
    %312 = vmatprep.subr.bf16.mxu0 0
    %313 = vmatpush1.bf16.msra.mxu0 0
    %314 = vmatprep.subr.bf16.mxu0 0
    %315 = vmatpush1.bf16.msra.mxu0 0
    %316 = vmatprep.subr.bf16.mxu0 0
    %317 = vmatpush1.bf16.msra.mxu0 0
    %318 = vmatprep.subr.bf16.mxu0 0
    %319 = vmatpush1.bf16.msra.mxu0 0
    %320 = vmatprep.subr.bf16.mxu0 0
    %321 = vmatpush1.bf16.msra.mxu0 0
    %322 = vmatprep.subr.bf16.mxu0 0
    %323 = vmatpush1.bf16.msra.mxu0 %v234
    %324 = vmatprep.subr.bf16.mxu0 0
    %325 = vmatpush2.bf16.msra.mxu0 0
    %326 = vmatprep.subr.bf16.mxu0 0
    %327 = vmatpush2.bf16.msra.mxu0 0
    %328 = vmatprep.subr.bf16.mxu0 0
    %329 = vmatpush2.bf16.msra.mxu0 0
    %330 = vmatprep.subr.bf16.mxu0 0
    %331 = vmatpush2.bf16.msra.mxu0 0
    %332 = vmatprep.subr.bf16.mxu0 0
    %333 = vmatpush2.bf16.msra.mxu0 0
    %334 = vmatprep.subr.bf16.mxu0 0
    %335 = vmatpush2.bf16.msra.mxu0 0
    %336 = vmatprep.subr.bf16.mxu0 0
    %337 = vmatpush2.bf16.msra.mxu0 0
    %338 = vmatprep.subr.bf16.mxu0 0
    %339 = vmatpush2.bf16.msra.mxu0 0
    %340 = vmatprep.mubr.bf16.mxu0 0
    %341 = vmatmul.mubr.bf16.gmra.mxu0 %v254
    %v342 = vpop.f32.mrf.mxu0
    %v343 = vadd.f32 %v294, %v342
    %v344 = vpop.f32.mrf.mxu0
    %v345 = vpop.f32.mrf.mxu0
    %v346 = vadd.f32 %v297, %v345
    %v347 = vpop.f32.mrf.mxu0
    %348 = vmatprep.mubr.bf16.mxu0 0
    %349 = vmatmul.mubr.bf16.gmra.mxu0 %v257
    %v350 = vpop.f32.mrf.mxu0
    %v351 = vadd.f32 %v302, %v350
    %v352 = vpop.f32.mrf.mxu0
    %v353 = vpop.f32.mrf.mxu0
    %v354 = vadd.f32 %v305, %v353
    %v355 = vpop.f32.mrf.mxu0
    %356 = vdwg.mxu0
    %v357 = vmul.f32 %v343, 0.5
    %v358 = vmul.f32 %v346, 0.5
    %v359 = vmul.f32 %v351, 0.5
    %v360 = vmul.f32 %v354, 0.5
    %v361 = vmul.f32 %v343, 0.044715
    %v362 = vmul.f32 %v346, 0.044715
    %v363 = vmul.f32 %v351, 0.044715
    %v364 = vmul.f32 %v354, 0.044715
    %v365 = vmul.f32 %v361, %v343
    %v366 = vmul.f32 %v362, %v346
    %v367 = vmul.f32 %v363, %v351
    %v368 = vmul.f32 %v364, %v354
    %v369 = vmul.f32 %v365, %v343
    %v370 = vmul.f32 %v366, %v346
    %v371 = vmul.f32 %v367, %v351
    %v372 = vmul.f32 %v368, %v354
    %v373 = vadd.f32 %v343, %v369
    %v374 = vadd.f32 %v346, %v370
    %v375 = vadd.f32 %v351, %v371
    %v376 = vadd.f32 %v354, %v372
    %v377 = vmul.f32 %v373, 0.7978846
    %v378 = vmul.f32 %v374, 0.7978846
    %v379 = vmul.f32 %v375, 0.7978846
    %v380 = vmul.f32 %v376, 0.7978846
    %v381 = vtanh.pop %v377
    %v382 = vtanh.pop %v378
    %v383 = vtanh.pop %v379
    %v384 = vtanh.pop %v380
    %v385 = vadd.f32 %v381, 1.0
    %v386 = vadd.f32 %v382, 1.0
    %v387 = vadd.f32 %v383, 1.0
    %v388 = vadd.f32 %v384, 1.0
    %v389 = vmul.f32 %v357, %v385
    %v390 = vmul.f32 %v358, %v386
    %v391 = vmul.f32 %v359, %v387
    %v392 = vmul.f32 %v360, %v388
    %v393 = vpack.c.bf16 %v390, %v389
    %v394 = vpack.c.bf16 %v392, %v391
    %vm395 = vcmask 64512
    %v397 = vsel %vm395, %v393, 0
    %v400 = vsel %vm395, %v394, 0
    %vm402 = vcmask 1043456
    %v404 = vsel %vm402, %v63, 0
    %406 = vmatprep.subr.bf16.mxu0 0
    %407 = vmatpush1.bf16.msra.mxu0 0
    %408 = vmatprep.subr.bf16.mxu0 0
    %409 = vmatpush1.bf16.msra.mxu0 0
    %410 = vmatprep.subr.bf16.mxu0 0
    %411 = vmatpush1.bf16.msra.mxu0 0
    %412 = vmatprep.subr.bf16.mxu0 0
    %413 = vmatpush1.bf16.msra.mxu0 0
    %414 = vmatprep.subr.bf16.mxu0 0
    %415 = vmatpush1.bf16.msra.mxu0 0
    %416 = vmatprep.subr.bf16.mxu0 0
    %417 = vmatpush1.bf16.msra.mxu0 0
    %418 = vmatprep.subr.bf16.mxu0 0
    %419 = vmatpush1.bf16.msra.mxu0 0
    %420 = vmatprep.subr.bf16.mxu0 0
    %421 = vmatpush1.bf16.msra.mxu0 %v404
    %422 = vmatprep.subr.bf16.mxu0 0
    %423 = vmatpush2.bf16.msra.mxu0 0
    %424 = vmatprep.subr.bf16.mxu0 0
    %425 = vmatpush2.bf16.msra.mxu0 0
    %426 = vmatprep.subr.bf16.mxu0 0
    %427 = vmatpush2.bf16.msra.mxu0 0
    %428 = vmatprep.subr.bf16.mxu0 0
    %429 = vmatpush2.bf16.msra.mxu0 0
    %430 = vmatprep.subr.bf16.mxu0 0
    %431 = vmatpush2.bf16.msra.mxu0 0
    %432 = vmatprep.subr.bf16.mxu0 0
    %433 = vmatpush2.bf16.msra.mxu0 0
    %434 = vmatprep.subr.bf16.mxu0 0
    %435 = vmatpush2.bf16.msra.mxu0 0
    %436 = vmatprep.subr.bf16.mxu0 0
    %437 = vmatpush2.bf16.msra.mxu0 0
    %438 = vmatprep.mubr.bf16.mxu0 0
    %439 = vmatmul.mubr.bf16.gmra.mxu0 %v397
    %v440 = vpop.f32.mrf.mxu0
    %v441 = vadd.f32 %v104, %v440
    %v442 = vpop.f32.mrf.mxu0
    %v443 = vpop.f32.mrf.mxu0
    %v444 = vadd.f32 %v104, %v443
    %v445 = vpop.f32.mrf.mxu0
    %446 = vmatprep.mubr.bf16.mxu0 0
    %447 = vmatmul.mubr.bf16.gmra.mxu0 %v400
    %v448 = vpop.f32.mrf.mxu0
    %v449 = vadd.f32 %v104, %v448
    %v450 = vpop.f32.mrf.mxu0
    %v451 = vpop.f32.mrf.mxu0
    %v452 = vadd.f32 %v104, %v451
    %v453 = vpop.f32.mrf.mxu0
    %454 = vdwg.mxu0
    %v455 = vmul.f32 %v441, 0.5
    %v456 = vmul.f32 %v444, 0.5
    %v457 = vmul.f32 %v449, 0.5
    %v458 = vmul.f32 %v452, 0.5
    %v459 = vmul.f32 %v441, 0.044715
    %v460 = vmul.f32 %v444, 0.044715
    %v461 = vmul.f32 %v449, 0.044715
    %v462 = vmul.f32 %v452, 0.044715
    %v463 = vmul.f32 %v459, %v441
    %v464 = vmul.f32 %v460, %v444
    %v465 = vmul.f32 %v461, %v449
    %v466 = vmul.f32 %v462, %v452
    %v467 = vmul.f32 %v463, %v441
    %v468 = vmul.f32 %v464, %v444
    %v469 = vmul.f32 %v465, %v449
    %v470 = vmul.f32 %v466, %v452
    %v471 = vadd.f32 %v441, %v467
    %v472 = vadd.f32 %v444, %v468
    %v473 = vadd.f32 %v449, %v469
    %v474 = vadd.f32 %v452, %v470
    %v475 = vmul.f32 %v471, 0.7978846
    %v476 = vmul.f32 %v472, 0.7978846
    %v477 = vmul.f32 %v473, 0.7978846
    %v478 = vmul.f32 %v474, 0.7978846
    %v479 = vtanh.pop %v475
    %v480 = vtanh.pop %v476
    %v481 = vtanh.pop %v477
    %v482 = vtanh.pop %v478
    %v483 = vadd.f32 %v479, 1.0
    %v484 = vadd.f32 %v480, 1.0
    %v485 = vadd.f32 %v481, 1.0
    %v486 = vadd.f32 %v482, 1.0
    %v487 = vmul.f32 %v455, %v483
    %v488 = vmul.f32 %v456, %v484
    %v489 = vmul.f32 %v457, %v485
    %v490 = vmul.f32 %v458, %v486
    %vm491 = vcmask 261120
    %v492 = vsel %vm491, %v487, 0.0
    %v493 = vsel %vm491, %v488, 0.0
    %v494 = vadd.f32 %v492, %v493
    %v495 = vsel %vm491, %v489, 0.0
    %v496 = vadd.f32 %v494, %v495
    %v497 = vsel %vm491, %v490, 0.0
    %v498 = vadd.f32 %v496, %v497
    %v499 = vrot.slane %v498, 4
    %v500 = vadd.f32 %v498, %v499
    %v501 = vrot.slane %v500, 2
    %v502 = vadd.f32 %v500, %v501
    %v503 = vrot.slane %v502, 1
    %v504 = vadd.f32 %v502, %v503
    %v505 = vrcp.pop 32.0
    %v506 = vmul.f32 %v504, %v505
    %v507 = vpack.c.bf16 %v506, %v506
    %v512 = vunpack.c.l.b16 %v84
    %v513 = vunpack.c.l.b16 %v85
    %v514 = vunpack.c.l.b16 %v86
    %v515 = vunpack.c.l.b16 %v87
    %v516 = vpack.c.b16 %v513, %v512
    %v517 = vpack.c.b16 %v515, %v514
    %v521 = vsel %vm491, %v507, 0
    %523 = vmatprep.subr.bf16.mxu0 0
    %524 = vmatpush1.bf16.msra.mxu0 0
    %525 = vmatprep.subr.bf16.mxu0 0
    %526 = vmatpush1.bf16.msra.mxu0 0
    %527 = vmatprep.subr.bf16.mxu0 0
    %528 = vmatpush1.bf16.msra.mxu0 0
    %529 = vmatprep.subr.bf16.mxu0 0
    %530 = vmatpush1.bf16.msra.mxu0 0
    %531 = vmatprep.subr.bf16.mxu0 0
    %532 = vmatpush1.bf16.msra.mxu0 0
    %533 = vmatprep.subr.bf16.mxu0 0
    %534 = vmatpush1.bf16.msra.mxu0 0
    %535 = vmatprep.subr.bf16.mxu0 0
    %536 = vmatpush1.bf16.msra.mxu0 %v517
    %537 = vmatprep.subr.bf16.mxu0 0
    %538 = vmatpush1.bf16.msra.mxu0 %v516
    %539 = vmatprep.subr.bf16.mxu0 0
    %540 = vmatpush2.bf16.msra.mxu0 0
    %541 = vmatprep.subr.bf16.mxu0 0
    %542 = vmatpush2.bf16.msra.mxu0 0
    %543 = vmatprep.subr.bf16.mxu0 0
    %544 = vmatpush2.bf16.msra.mxu0 0
    %545 = vmatprep.subr.bf16.mxu0 0
    %546 = vmatpush2.bf16.msra.mxu0 0
    %547 = vmatprep.subr.bf16.mxu0 0
    %548 = vmatpush2.bf16.msra.mxu0 0
    %549 = vmatprep.subr.bf16.mxu0 0
    %550 = vmatpush2.bf16.msra.mxu0 0
    %551 = vmatprep.subr.bf16.mxu0 0
    %552 = vmatpush2.bf16.msra.mxu0 0
    %553 = vmatprep.subr.bf16.mxu0 0
    %554 = vmatpush2.bf16.msra.mxu0 0
    %555 = vmatprep.mubr.bf16.mxu0 0
    %556 = vmatmul.mubr.bf16.gmra.mxu0 %v521
    %v557 = vpop.f32.mrf.mxu0
    %v558 = vadd.f32 0.0, %v557
    %v559 = vpop.f32.mrf.mxu0
    %v560 = vpop.f32.mrf.mxu0
    %v561 = vpop.f32.mrf.mxu0
    %562 = vdwg.mxu0
    %v563 = vlaneseq
    %v564 = vshrl.u32 %v563, 7
    %v565 = vsub.s32 0, %v564
    %v566 = vrot.slane %v558, %v565
    %v567 = vsub.f32 %v487, %v566
    %v568 = vsub.f32 %v488, %v566
    %v569 = vsub.f32 %v489, %v566
    %v570 = vsub.f32 %v490, %v566
    %v571 = vmul.f32 %v567, %v567
    %v572 = vmul.f32 %v568, %v568
    %v573 = vmul.f32 %v569, %v569
    %v574 = vmul.f32 %v570, %v570
    %v575 = vsel %vm491, %v571, 0.0
    %v576 = vsel %vm491, %v572, 0.0
    %v577 = vadd.f32 %v575, %v576
    %v578 = vsel %vm491, %v573, 0.0
    %v579 = vadd.f32 %v577, %v578
    %v580 = vsel %vm491, %v574, 0.0
    %v581 = vadd.f32 %v579, %v580
    %v582 = vrot.slane %v581, 4
    %v583 = vadd.f32 %v581, %v582
    %v584 = vrot.slane %v583, 2
    %v585 = vadd.f32 %v583, %v584
    %v586 = vrot.slane %v585, 1
    %v587 = vadd.f32 %v585, %v586
    %v588 = vmul.f32 %v587, %v505
    %v589 = vpack.c.bf16 %v588, %v588
    %v591 = vsel %vm491, %v589, 0
    %593 = vmatprep.subr.bf16.mxu0 0
    %594 = vmatpush1.bf16.msra.mxu0 0
    %595 = vmatprep.subr.bf16.mxu0 0
    %596 = vmatpush1.bf16.msra.mxu0 0
    %597 = vmatprep.subr.bf16.mxu0 0
    %598 = vmatpush1.bf16.msra.mxu0 0
    %599 = vmatprep.subr.bf16.mxu0 0
    %600 = vmatpush1.bf16.msra.mxu0 0
    %601 = vmatprep.subr.bf16.mxu0 0
    %602 = vmatpush1.bf16.msra.mxu0 0
    %603 = vmatprep.subr.bf16.mxu0 0
    %604 = vmatpush1.bf16.msra.mxu0 0
    %605 = vmatprep.subr.bf16.mxu0 0
    %606 = vmatpush1.bf16.msra.mxu0 %v517
    %607 = vmatprep.subr.bf16.mxu0 0
    %608 = vmatpush1.bf16.msra.mxu0 %v516
    %609 = vmatprep.subr.bf16.mxu0 0
    %610 = vmatpush2.bf16.msra.mxu0 0
    %611 = vmatprep.subr.bf16.mxu0 0
    %612 = vmatpush2.bf16.msra.mxu0 0
    %613 = vmatprep.subr.bf16.mxu0 0
    %614 = vmatpush2.bf16.msra.mxu0 0
    %615 = vmatprep.subr.bf16.mxu0 0
    %616 = vmatpush2.bf16.msra.mxu0 0
    %617 = vmatprep.subr.bf16.mxu0 0
    %618 = vmatpush2.bf16.msra.mxu0 0
    %619 = vmatprep.subr.bf16.mxu0 0
    %620 = vmatpush2.bf16.msra.mxu0 0
    %621 = vmatprep.subr.bf16.mxu0 0
    %622 = vmatpush2.bf16.msra.mxu0 0
    %623 = vmatprep.subr.bf16.mxu0 0
    %624 = vmatpush2.bf16.msra.mxu0 0
    %625 = vmatprep.mubr.bf16.mxu0 0
    %626 = vmatmul.mubr.bf16.gmra.mxu0 %v591
    %v627 = vpop.f32.mrf.mxu0
    %v628 = vadd.f32 1e-05, %v627
    %v629 = vpop.f32.mrf.mxu0
    %v630 = vpop.f32.mrf.mxu0
    %v631 = vpop.f32.mrf.mxu0
    %632 = vdwg.mxu0
    %v633 = vrsqrt.pop %v628
    %v634 = vmul.f32 %v108, %v633
    %v635 = vlaneseq
    %v636 = vshrl.u32 %v635, 7
    %v637 = vsub.s32 0, %v636
    %v638 = vrot.slane %v634, %v637
    %v639 = vmul.f32 %v567, %v638
    %v640 = vmul.f32 %v568, %v638
    %v641 = vmul.f32 %v569, %v638
    %v642 = vmul.f32 %v570, %v638
    %v643 = vadd.f32 %v639, %v109
    %v644 = vadd.f32 %v640, %v109
    %v645 = vadd.f32 %v641, %v109
    %v646 = vadd.f32 %v642, %v109
    %v647 = vpack.c.bf16 %v644, %v643
    %v648 = vpack.c.bf16 %v646, %v645
    %v653 = vunpack.c.l.b16 %v64
    %v654 = vunpack.c.l.b16 %v65
    %v655 = vunpack.c.l.b16 %v66
    %v656 = vunpack.c.l.b16 %v67
    %v657 = vpack.c.b16 %v654, %v653
    %v658 = vpack.c.b16 %v656, %v655
    %v662 = vsel %vm491, %v647, 0
    %v665 = vsel %vm491, %v648, 0
    %667 = vmatprep.subr.bf16.mxu0 0
    %668 = vmatpush1.bf16.msra.mxu0 0
    %669 = vmatprep.subr.bf16.mxu0 0
    %670 = vmatpush1.bf16.msra.mxu0 0
    %671 = vmatprep.subr.bf16.mxu0 0
    %672 = vmatpush1.bf16.msra.mxu0 0
    %673 = vmatprep.subr.bf16.mxu0 0
    %674 = vmatpush1.bf16.msra.mxu0 0
    %675 = vmatprep.subr.bf16.mxu0 0
    %676 = vmatpush1.bf16.msra.mxu0 0
    %677 = vmatprep.subr.bf16.mxu0 0
    %678 = vmatpush1.bf16.msra.mxu0 0
    %679 = vmatprep.subr.bf16.mxu0 0
    %680 = vmatpush1.bf16.msra.mxu0 %v658
    %681 = vmatprep.subr.bf16.mxu0 0
    %682 = vmatpush1.bf16.msra.mxu0 %v657
    %683 = vmatprep.subr.bf16.mxu0 0
    %684 = vmatpush2.bf16.msra.mxu0 0
    %685 = vmatprep.subr.bf16.mxu0 0
    %686 = vmatpush2.bf16.msra.mxu0 0
    %687 = vmatprep.subr.bf16.mxu0 0
    %688 = vmatpush2.bf16.msra.mxu0 0
    %689 = vmatprep.subr.bf16.mxu0 0
    %690 = vmatpush2.bf16.msra.mxu0 0
    %691 = vmatprep.subr.bf16.mxu0 0
    %692 = vmatpush2.bf16.msra.mxu0 0
    %693 = vmatprep.subr.bf16.mxu0 0
    %694 = vmatpush2.bf16.msra.mxu0 0
    %695 = vmatprep.subr.bf16.mxu0 0
    %696 = vmatpush2.bf16.msra.mxu0 0
    %697 = vmatprep.subr.bf16.mxu0 0
    %698 = vmatpush2.bf16.msra.mxu0 0
    %699 = vmatprep.mubr.bf16.mxu0 0
    %700 = vmatmul.mubr.bf16.gmra.mxu0 %v662
    %v701 = vpop.f32.mrf.mxu0
    %v702 = vadd.f32 %v105, %v701
    %v703 = vpop.f32.mrf.mxu0
    %v704 = vpop.f32.mrf.mxu0
    %v705 = vadd.f32 %v105, %v704
    %v706 = vpop.f32.mrf.mxu0
    %707 = vmatprep.mubr.bf16.mxu0 0
    %708 = vmatmul.mubr.bf16.gmra.mxu0 %v665
    %v709 = vpop.f32.mrf.mxu0
    %v710 = vadd.f32 %v105, %v709
    %v711 = vpop.f32.mrf.mxu0
    %v712 = vpop.f32.mrf.mxu0
    %v713 = vadd.f32 %v105, %v712
    %v714 = vpop.f32.mrf.mxu0
    %715 = vdwg.mxu0
    %v716 = vmul.f32 %v702, 0.5
    %v717 = vmul.f32 %v705, 0.5
    %v718 = vmul.f32 %v710, 0.5
    %v719 = vmul.f32 %v713, 0.5
    %v720 = vmul.f32 %v702, 0.044715
    %v721 = vmul.f32 %v705, 0.044715
    %v722 = vmul.f32 %v710, 0.044715
    %v723 = vmul.f32 %v713, 0.044715
    %v724 = vmul.f32 %v720, %v702
    %v725 = vmul.f32 %v721, %v705
    %v726 = vmul.f32 %v722, %v710
    %v727 = vmul.f32 %v723, %v713
    %v728 = vmul.f32 %v724, %v702
    %v729 = vmul.f32 %v725, %v705
    %v730 = vmul.f32 %v726, %v710
    %v731 = vmul.f32 %v727, %v713
    %v732 = vadd.f32 %v702, %v728
    %v733 = vadd.f32 %v705, %v729
    %v734 = vadd.f32 %v710, %v730
    %v735 = vadd.f32 %v713, %v731
    %v736 = vmul.f32 %v732, 0.7978846
    %v737 = vmul.f32 %v733, 0.7978846
    %v738 = vmul.f32 %v734, 0.7978846
    %v739 = vmul.f32 %v735, 0.7978846
    %v740 = vtanh.pop %v736
    %v741 = vtanh.pop %v737
    %v742 = vtanh.pop %v738
    %v743 = vtanh.pop %v739
    %v744 = vadd.f32 %v740, 1.0
    %v745 = vadd.f32 %v741, 1.0
    %v746 = vadd.f32 %v742, 1.0
    %v747 = vadd.f32 %v743, 1.0
    %v748 = vmul.f32 %v716, %v744
    %v749 = vmul.f32 %v717, %v745
    %v750 = vmul.f32 %v718, %v746
    %v751 = vmul.f32 %v719, %v747
    %v752 = vadd.f32 %v748, %v749
    %v753 = vadd.f32 %v752, %v750
    %v754 = vadd.f32 %v753, %v751
    %v755 = vrot.slane %v754, 4
    %v756 = vadd.f32 %v754, %v755
    %v757 = vrot.slane %v756, 2
    %v758 = vadd.f32 %v756, %v757
    %v759 = vrot.slane %v758, 1
    %v760 = vadd.f32 %v758, %v759
    %v761 = vmul.f32 %v760, %v505
    %v762 = vpack.c.bf16 %v761, %v761
    %v779 = vunpack.c.l.b16 %v88
    %v780 = vunpack.c.l.b16 %v89
    %v781 = vunpack.c.l.b16 %v90
    %v782 = vunpack.c.l.b16 %v91
    %v783 = vunpack.c.l.b16 %v92
    %v784 = vunpack.c.l.b16 %v93
    %v785 = vunpack.c.l.b16 %v94
    %v786 = vunpack.c.l.b16 %v95
    %v787 = vunpack.c.l.b16 %v96
    %v788 = vunpack.c.l.b16 %v97
    %v789 = vunpack.c.l.b16 %v98
    %v790 = vunpack.c.l.b16 %v99
    %v791 = vunpack.c.l.b16 %v100
    %v792 = vunpack.c.l.b16 %v101
    %v793 = vunpack.c.l.b16 %v102
    %v794 = vunpack.c.l.b16 %v103
    %v795 = vpack.c.b16 %v780, %v779
    %v796 = vpack.c.b16 %v782, %v781
    %v797 = vpack.c.b16 %v784, %v783
    %v798 = vpack.c.b16 %v786, %v785
    %v799 = vpack.c.b16 %v788, %v787
    %v800 = vpack.c.b16 %v790, %v789
    %v801 = vpack.c.b16 %v792, %v791
    %v802 = vpack.c.b16 %v794, %v793
    %811 = vmatprep.subr.bf16.mxu0 0
    %812 = vmatpush1.bf16.msra.mxu0 %v802
    %813 = vmatprep.subr.bf16.mxu0 0
    %814 = vmatpush1.bf16.msra.mxu0 %v801
    %815 = vmatprep.subr.bf16.mxu0 0
    %816 = vmatpush1.bf16.msra.mxu0 %v800
    %817 = vmatprep.subr.bf16.mxu0 0
    %818 = vmatpush1.bf16.msra.mxu0 %v799
    %819 = vmatprep.subr.bf16.mxu0 0
    %820 = vmatpush1.bf16.msra.mxu0 %v798
    %821 = vmatprep.subr.bf16.mxu0 0
    %822 = vmatpush1.bf16.msra.mxu0 %v797
    %823 = vmatprep.subr.bf16.mxu0 0
    %824 = vmatpush1.bf16.msra.mxu0 %v796
    %825 = vmatprep.subr.bf16.mxu0 0
    %826 = vmatpush1.bf16.msra.mxu0 %v795
    %827 = vmatprep.subr.bf16.mxu0 0
    %828 = vmatpush2.bf16.msra.mxu0 0
    %829 = vmatprep.subr.bf16.mxu0 0
    %830 = vmatpush2.bf16.msra.mxu0 0
    %831 = vmatprep.subr.bf16.mxu0 0
    %832 = vmatpush2.bf16.msra.mxu0 0
    %833 = vmatprep.subr.bf16.mxu0 0
    %834 = vmatpush2.bf16.msra.mxu0 0
    %835 = vmatprep.subr.bf16.mxu0 0
    %836 = vmatpush2.bf16.msra.mxu0 0
    %837 = vmatprep.subr.bf16.mxu0 0
    %838 = vmatpush2.bf16.msra.mxu0 0
    %839 = vmatprep.subr.bf16.mxu0 0
    %840 = vmatpush2.bf16.msra.mxu0 0
    %841 = vmatprep.subr.bf16.mxu0 0
    %842 = vmatpush2.bf16.msra.mxu0 0
    %843 = vmatprep.mubr.bf16.mxu0 0
    %844 = vmatmul.mubr.bf16.gmra.mxu0 %v762
    %v845 = vpop.f32.mrf.mxu0
    %v846 = vadd.f32 0.0, %v845
    %v847 = vpop.f32.mrf.mxu0
    %v848 = vpop.f32.mrf.mxu0
    %v849 = vpop.f32.mrf.mxu0
    %850 = vdwg.mxu0
    %v851 = vlaneseq
    %v852 = vshrl.u32 %v851, 7
    %v853 = vsub.s32 0, %v852
    %v854 = vrot.slane %v846, %v853
    %v855 = vsub.f32 %v748, %v854
    %v856 = vsub.f32 %v749, %v854
    %v857 = vsub.f32 %v750, %v854
    %v858 = vsub.f32 %v751, %v854
    %v859 = vmul.f32 %v855, %v855
    %v860 = vmul.f32 %v856, %v856
    %v861 = vmul.f32 %v857, %v857
    %v862 = vmul.f32 %v858, %v858
    %v863 = vadd.f32 %v859, %v860
    %v864 = vadd.f32 %v863, %v861
    %v865 = vadd.f32 %v864, %v862
    %v866 = vrot.slane %v865, 4
    %v867 = vadd.f32 %v865, %v866
    %v868 = vrot.slane %v867, 2
    %v869 = vadd.f32 %v867, %v868
    %v870 = vrot.slane %v869, 1
    %v871 = vadd.f32 %v869, %v870
    %v872 = vmul.f32 %v871, %v505
    %v873 = vpack.c.bf16 %v872, %v872
    %874 = vmatprep.subr.bf16.mxu0 0
    %875 = vmatpush1.bf16.msra.mxu0 %v802
    %876 = vmatprep.subr.bf16.mxu0 0
    %877 = vmatpush1.bf16.msra.mxu0 %v801
    %878 = vmatprep.subr.bf16.mxu0 0
    %879 = vmatpush1.bf16.msra.mxu0 %v800
    %880 = vmatprep.subr.bf16.mxu0 0
    %881 = vmatpush1.bf16.msra.mxu0 %v799
    %882 = vmatprep.subr.bf16.mxu0 0
    %883 = vmatpush1.bf16.msra.mxu0 %v798
    %884 = vmatprep.subr.bf16.mxu0 0
    %885 = vmatpush1.bf16.msra.mxu0 %v797
    %886 = vmatprep.subr.bf16.mxu0 0
    %887 = vmatpush1.bf16.msra.mxu0 %v796
    %888 = vmatprep.subr.bf16.mxu0 0
    %889 = vmatpush1.bf16.msra.mxu0 %v795
    %890 = vmatprep.subr.bf16.mxu0 0
    %891 = vmatpush2.bf16.msra.mxu0 0
    %892 = vmatprep.subr.bf16.mxu0 0
    %893 = vmatpush2.bf16.msra.mxu0 0
    %894 = vmatprep.subr.bf16.mxu0 0
    %895 = vmatpush2.bf16.msra.mxu0 0
    %896 = vmatprep.subr.bf16.mxu0 0
    %897 = vmatpush2.bf16.msra.mxu0 0
    %898 = vmatprep.subr.bf16.mxu0 0
    %899 = vmatpush2.bf16.msra.mxu0 0
    %900 = vmatprep.subr.bf16.mxu0 0
    %901 = vmatpush2.bf16.msra.mxu0 0
    %902 = vmatprep.subr.bf16.mxu0 0
    %903 = vmatpush2.bf16.msra.mxu0 0
    %904 = vmatprep.subr.bf16.mxu0 0
    %905 = vmatpush2.bf16.msra.mxu0 0
    %906 = vmatprep.mubr.bf16.mxu0 0
    %907 = vmatmul.mubr.bf16.gmra.mxu0 %v873
    %v908 = vpop.f32.mrf.mxu0
    %v909 = vadd.f32 1e-05, %v908
    %v910 = vpop.f32.mrf.mxu0
    %v911 = vpop.f32.mrf.mxu0
    %v912 = vpop.f32.mrf.mxu0
    %913 = vdwg.mxu0
    %v914 = vrsqrt.pop %v909
    %v915 = vmul.f32 %v110, %v914
    %v916 = vlaneseq
    %v917 = vshrl.u32 %v916, 7
    %v918 = vsub.s32 0, %v917
    %v919 = vrot.slane %v915, %v918
    %v920 = vmul.f32 %v855, %v919
    %v921 = vmul.f32 %v856, %v919
    %v922 = vmul.f32 %v857, %v919
    %v923 = vmul.f32 %v858, %v919
    %v924 = vadd.f32 %v920, %v111
    %v925 = vadd.f32 %v921, %v111
    %v926 = vadd.f32 %v922, %v111
    %v927 = vadd.f32 %v923, %v111
    %v928 = vpack.c.bf16 %v925, %v924
    %v929 = vpack.c.bf16 %v927, %v926
    %v931 = vlaneseq
    %v932 = vshrl.u32 %v931, 7
    %v933 = vsub.s32 0, %v932
    %v934 = vrot.slane %v107, %v933
    %v935 = vlaneseq
    %v936 = vshrl.u32 %v935, 7
    %v937 = vsub.s32 1, %v936
    %v938 = vrot.slane %v107, %v937
    %v957 = vunpack.c.l.b16 %v68
    %v958 = vunpack.c.h.b16 %v68
    %v959 = vunpack.c.l.b16 %v69
    %v960 = vunpack.c.h.b16 %v69
    %v961 = vunpack.c.l.b16 %v70
    %v962 = vunpack.c.h.b16 %v70
    %v963 = vunpack.c.l.b16 %v71
    %v964 = vunpack.c.h.b16 %v71
    %v965 = vunpack.c.l.b16 %v72
    %v966 = vunpack.c.h.b16 %v72
    %v967 = vunpack.c.l.b16 %v73
    %v968 = vunpack.c.h.b16 %v73
    %v969 = vunpack.c.l.b16 %v74
    %v970 = vunpack.c.h.b16 %v74
    %v971 = vunpack.c.l.b16 %v75
    %v972 = vunpack.c.h.b16 %v75
    %v973 = vunpack.c.l.b16 %v76
    %v974 = vunpack.c.h.b16 %v76
    %v975 = vunpack.c.l.b16 %v77
    %v976 = vunpack.c.h.b16 %v77
    %v977 = vunpack.c.l.b16 %v78
    %v978 = vunpack.c.h.b16 %v78
    %v979 = vunpack.c.l.b16 %v79
    %v980 = vunpack.c.h.b16 %v79
    %v981 = vunpack.c.l.b16 %v80
    %v982 = vunpack.c.h.b16 %v80
    %v983 = vunpack.c.l.b16 %v81
    %v984 = vunpack.c.h.b16 %v81
    %v985 = vunpack.c.l.b16 %v82
    %v986 = vunpack.c.h.b16 %v82
    %v987 = vunpack.c.l.b16 %v83
    %v988 = vunpack.c.h.b16 %v83
    %v989 = vpack.c.b16 %v959, %v957
    %v990 = vpack.c.b16 %v960, %v958
    %v991 = vpack.c.b16 %v963, %v961
    %v992 = vpack.c.b16 %v964, %v962
    %v993 = vpack.c.b16 %v967, %v965
    %v994 = vpack.c.b16 %v968, %v966
    %v995 = vpack.c.b16 %v971, %v969
    %v996 = vpack.c.b16 %v972, %v970
    %v997 = vpack.c.b16 %v975, %v973
    %v998 = vpack.c.b16 %v976, %v974
    %v999 = vpack.c.b16 %v979, %v977
    %v1000 = vpack.c.b16 %v980, %v978
    %v1001 = vpack.c.b16 %v983, %v981
    %v1002 = vpack.c.b16 %v984, %v982
    %v1003 = vpack.c.b16 %v987, %v985
    %v1004 = vpack.c.b16 %v988, %v986
    %1021 = vmatprep.subr.bf16.mxu0 %v1004
    %1022 = vmatpush1.bf16.msra.mxu0 %v1003
    %1023 = vmatprep.subr.bf16.mxu0 %v1002
    %1024 = vmatpush1.bf16.msra.mxu0 %v1001
    %1025 = vmatprep.subr.bf16.mxu0 %v1000
    %1026 = vmatpush1.bf16.msra.mxu0 %v999
    %1027 = vmatprep.subr.bf16.mxu0 %v998
    %1028 = vmatpush1.bf16.msra.mxu0 %v997
    %1029 = vmatprep.subr.bf16.mxu0 %v996
    %1030 = vmatpush1.bf16.msra.mxu0 %v995
    %1031 = vmatprep.subr.bf16.mxu0 %v994
    %1032 = vmatpush1.bf16.msra.mxu0 %v993
    %1033 = vmatprep.subr.bf16.mxu0 %v992
    %1034 = vmatpush1.bf16.msra.mxu0 %v991
    %1035 = vmatprep.subr.bf16.mxu0 %v990
    %1036 = vmatpush1.bf16.msra.mxu0 %v989
    %1037 = vmatprep.subr.bf16.mxu0 0
    %1038 = vmatpush2.bf16.msra.mxu0 0
    %1039 = vmatprep.subr.bf16.mxu0 0
    %1040 = vmatpush2.bf16.msra.mxu0 0
    %1041 = vmatprep.subr.bf16.mxu0 0
    %1042 = vmatpush2.bf16.msra.mxu0 0
    %1043 = vmatprep.subr.bf16.mxu0 0
    %1044 = vmatpush2.bf16.msra.mxu0 0
    %1045 = vmatprep.subr.bf16.mxu0 0
    %1046 = vmatpush2.bf16.msra.mxu0 0
    %1047 = vmatprep.subr.bf16.mxu0 0
    %1048 = vmatpush2.bf16.msra.mxu0 0
    %1049 = vmatprep.subr.bf16.mxu0 0
    %1050 = vmatpush2.bf16.msra.mxu0 0
    %1051 = vmatprep.subr.bf16.mxu0 0
    %1052 = vmatpush2.bf16.msra.mxu0 0
    %1053 = vmatprep.mubr.bf16.mxu0 0
    %1054 = vmatmul.mubr.bf16.gmra.mxu0 %v928
    %v1055 = vpop.f32.mrf.mxu0
    %v1056 = vadd.f32 %v934, %v1055
    %v1057 = vpop.f32.mrf.mxu0
    %v1058 = vadd.f32 %v938, %v1057
    %v1059 = vpop.f32.mrf.mxu0
    %v1060 = vadd.f32 %v934, %v1059
    %v1061 = vpop.f32.mrf.mxu0
    %v1062 = vadd.f32 %v938, %v1061
    %1063 = vmatprep.mubr.bf16.mxu0 0
    %1064 = vmatmul.mubr.bf16.gmra.mxu0 %v929
    %v1065 = vpop.f32.mrf.mxu0
    %v1066 = vadd.f32 %v934, %v1065
    %v1067 = vpop.f32.mrf.mxu0
    %v1068 = vadd.f32 %v938, %v1067
    %v1069 = vpop.f32.mrf.mxu0
    %v1070 = vadd.f32 %v934, %v1069
    %v1071 = vpop.f32.mrf.mxu0
    %v1072 = vadd.f32 %v938, %v1071
    %1073 = vdwg.mxu0
    %v1074 = vand.u32 2147483647, %v1056
    %v1075 = vand.u32 2147483647, %v1058
    %v1076 = vand.u32 2147483647, %v1060
    %v1077 = vand.u32 2147483647, %v1062
    %v1078 = vand.u32 2147483647, %v1066
    %v1079 = vand.u32 2147483647, %v1068
    %v1080 = vand.u32 2147483647, %v1070
    %v1081 = vand.u32 2147483647, %v1072
    %v1082 = vsub.f32 0.0, %v1074
    %v1083 = vsub.f32 0.0, %v1075
    %v1084 = vsub.f32 0.0, %v1076
    %v1085 = vsub.f32 0.0, %v1077
    %v1086 = vsub.f32 0.0, %v1078
    %v1087 = vsub.f32 0.0, %v1079
    %v1088 = vsub.f32 0.0, %v1080
    %v1089 = vsub.f32 0.0, %v1081
    %v1090 = vmul.f32 %v1082, 1.442695
    %v1091 = vpow.pop %v1090
    %v1092 = vmul.f32 %v1083, 1.442695
    %v1093 = vpow.pop %v1092
    %v1094 = vmul.f32 %v1084, 1.442695
    %v1095 = vpow.pop %v1094
    %v1096 = vmul.f32 %v1085, 1.442695
    %v1097 = vpow.pop %v1096
    %v1098 = vmul.f32 %v1086, 1.442695
    %v1099 = vpow.pop %v1098
    %v1100 = vmul.f32 %v1087, 1.442695
    %v1101 = vpow.pop %v1100
    %v1102 = vmul.f32 %v1088, 1.442695
    %v1103 = vpow.pop %v1102
    %v1104 = vmul.f32 %v1089, 1.442695
    %v1105 = vpow.pop %v1104
    %v1106 = vadd.f32 %v1091, 1.0
    %v1107 = vadd.f32 %v1093, 1.0
    %v1108 = vadd.f32 %v1095, 1.0
    %v1109 = vadd.f32 %v1097, 1.0
    %v1110 = vadd.f32 %v1099, 1.0
    %v1111 = vadd.f32 %v1101, 1.0
    %v1112 = vadd.f32 %v1103, 1.0
    %v1113 = vadd.f32 %v1105, 1.0
    %v1114 = vrcp.pop %v1106
    %v1115 = vrcp.pop %v1107
    %v1116 = vrcp.pop %v1108
    %v1117 = vrcp.pop %v1109
    %v1118 = vrcp.pop %v1110
    %v1119 = vrcp.pop %v1111
    %v1120 = vrcp.pop %v1112
    %v1121 = vrcp.pop %v1113
    %vm1122 = vcmp.ge.f32.partialorder %v1056, 0.0
    %vm1123 = vcmp.ge.f32.partialorder %v1058, 0.0
    %vm1124 = vcmp.ge.f32.partialorder %v1060, 0.0
    %vm1125 = vcmp.ge.f32.partialorder %v1062, 0.0
    %vm1126 = vcmp.ge.f32.partialorder %v1066, 0.0
    %vm1127 = vcmp.ge.f32.partialorder %v1068, 0.0
    %vm1128 = vcmp.ge.f32.partialorder %v1070, 0.0
    %vm1129 = vcmp.ge.f32.partialorder %v1072, 0.0
    %v1130 = vmul.f32 %v1091, %v1114
    %v1131 = vmul.f32 %v1093, %v1115
    %v1132 = vmul.f32 %v1095, %v1116
    %v1133 = vmul.f32 %v1097, %v1117
    %v1134 = vmul.f32 %v1099, %v1118
    %v1135 = vmul.f32 %v1101, %v1119
    %v1136 = vmul.f32 %v1103, %v1120
    %v1137 = vmul.f32 %v1105, %v1121
    %v1138 = vsel %vm1122, %v1114, %v1130
    %v1139 = vsel %vm1123, %v1115, %v1131
    %v1140 = vsel %vm1124, %v1116, %v1132
    %v1141 = vsel %vm1125, %v1117, %v1133
    %v1142 = vsel %vm1126, %v1118, %v1134
    %v1143 = vsel %vm1127, %v1119, %v1135
    %v1144 = vsel %vm1128, %v1120, %v1136
    %v1145 = vsel %vm1129, %v1121, %v1137
    %v1146 = vmin.f32 %v1138, 1.0
    %v1147 = vmin.f32 %v1139, 1.0
    %v1148 = vmin.f32 %v1140, 1.0
    %v1149 = vmin.f32 %v1141, 1.0
    %v1150 = vmin.f32 %v1142, 1.0
    %v1151 = vmin.f32 %v1143, 1.0
    %v1152 = vmin.f32 %v1144, 1.0
    %v1153 = vmin.f32 %v1145, 1.0
    %1154 = vst [vmem:[%s3] sm:$0xff] %v1146
    %1155 = vst [vmem:[%s3 + $0x8] sm:$0xff] %v1147
    %1156 = vst [vmem:[%s3 + $0x10] sm:$0xff] %v1148
    %1157 = vst [vmem:[%s3 + $0x18] sm:$0xff] %v1149
    %1158 = vst [vmem:[%s3 + $0x20] sm:$0xff] %v1150
    %1159 = vst [vmem:[%s3 + $0x28] sm:$0xff] %v1151
    %1160 = vst [vmem:[%s3 + $0x30] sm:$0xff] %v1152
    %1161 = vst [vmem:[%s3 + $0x38] sm:$0xff] %v1153
    // Predicated region
    $region18: #{_lambda_.1} parent=1 // pred_check
      _
    $region19: #{_lambda_.1} parent=1 // pred_check_branch
      %1163 = sbr.rel (0) target = $region21
    $region20: #{_lambda_.1} parent=1 // pred_region
      _
    $region21: #{_lambda_.1} parent=1 // pred_fallthru
      _
    // Predicated region
    $region22: #{_lambda_.1} parent=1 // pred_check
      _
    $region23: #{_lambda_.1} parent=1 // pred_check_branch
      %1165 = sbr.rel (0) target = $region25
    $region24: #{_lambda_.1} parent=1 // pred_region
      _
    $region25: #{_lambda_.1} parent=1 // pred_fallthru
      _
    %1166 = vsyncpa [#allocation3], 1

</llo_original>
